<compile_context>
chip_gen: v6e
topology: v6e:2x2x1
jax: 0.10.0
libtpu: 0.0.40
codegen_flags: <defaults>
</compile_context>

<pallas_src>
import jax
import jax.numpy as jnp
from jax.experimental import pallas as pl
from jax.experimental.pallas import tpu as pltpu

ALPHA = 0.25
GAMMA = 2.0          # == 2 -> exact square, avoids transcendental pow
CLAMP_LO = 0.0003
CLAMP_HI = 0.9997

# Max sublane rows per N-tile: 256 rows * 128 lanes = 32768 positions per grid
# step -> 10 ch * 32768 * 4 B = 1.25 MiB block, ~2.5 MiB double-buffered.
_TS_MAX = 256


def _lbp_loss_kernel(packed_ref, out_ref,
                     cell_num, cell_cnt, ab_num, ab_cnt,
                     mu_num, mu_cnt, pt_num, pt_cnt):
    n = pl.program_id(1)

    @pl.when(n == 0)
    def _reset():
        for r in (cell_num, cell_cnt, ab_num, ab_cnt,
                  mu_num, mu_cnt, pt_num, pt_cnt):
            r[...] = jnp.zeros_like(r)

    def rsum(x):                                   # (TS, 128) -> (1, 1)
        return jnp.sum(x, axis=(0, 1), keepdims=True)

    def focal_partial(pred, lab):
        pred = jnp.clip(pred, CLAMP_LO, CLAMP_HI)  # Clamp().apply
        is_one = lab == 1.0
        alpha = jnp.where(is_one, ALPHA, 1.0 - ALPHA)
        fw = jnp.where(is_one, 1.0 - pred, pred)
        # labels in {-1, 0, 1}: after the != -1 mask, the BCE term reduces to
        # a single log per element (half the EUP work of 2 logs + muls/adds).
        ce = -jnp.log(jnp.where(is_one, pred, 1.0 - pred))
        loss = jnp.where(lab != -1.0, alpha * (fw * fw) * ce, 0.0)
        return rsum(loss), rsum((lab > -1.0).astype(jnp.float32))

    # channel layout: 0 cell, 1 ab, 2 multi, 3 point_x, 4 point_y, 5..9 labels
    cell_p = packed_ref[0, 0]
    ab_p = packed_ref[0, 1]
    mu_p = packed_ref[0, 2]
    px = packed_ref[0, 3]
    py = packed_ref[0, 4]
    lab0 = packed_ref[0, 5]
    lab1 = packed_ref[0, 6]
    lab2 = packed_ref[0, 7]
    lab3 = packed_ref[0, 8]
    lab4 = packed_ref[0, 9]

    num, cnt = focal_partial(cell_p, lab0)
    cell_num[...] += num
    cell_cnt[...] += cnt

    num, cnt = focal_partial(ab_p, lab1)
    ab_num[...] += num
    ab_cnt[...] += cnt

    num, cnt = focal_partial(mu_p, lab4)
    mu_num[...] += num
    mu_cnt[...] += cnt

    # point branch: MSE over rows where labels[:, :, 1] == 1 (both coords)
    sel = lab1 == 1.0
    dx = px - lab2
    dy = py - lab3
    pt_num[...] += rsum(jnp.where(sel, dx * dx + dy * dy, 0.0))
    pt_cnt[...] += rsum(sel.astype(jnp.float32))

    @pl.when(n == pl.num_programs(1) - 1)
    def _finalize():
        # Denominators clamped to >= 1: identical to the reference whenever a
        # branch has at least one valid label (the masked numerator is 0
        # otherwise, where the PyTorch reference would emit NaN from 0/0).
        cell_l = cell_num[...] / jnp.maximum(cell_cnt[...], 1.0)
        ab_l = ab_num[...] / jnp.maximum(ab_cnt[...], 1.0)
        mu_l = mu_num[...] / jnp.maximum(mu_cnt[...], 1.0)
        pt_l = pt_num[...] / jnp.maximum(2.0 * pt_cnt[...], 1.0)
        lane = jax.lax.broadcasted_iota(jnp.int32, (1, 4), 1)
        packed_out = (jnp.where(lane == 0, cell_l, 0.0)
                      + jnp.where(lane == 1, ab_l, 0.0)
                      + jnp.where(lane == 2, mu_l, 0.0)
                      + jnp.where(lane == 3, pt_l, 0.0))
        out_ref[0] = packed_out                    # (1, 4) row for this batch


def lbp_loss(cell_out, ab_cell_out, multi_out, point, labels):
    """Inputs follow the PyTorch convention:
       cell_out, ab_cell_out, multi_out: (B, N, 1)
       point: (B, N, 2);  labels: (B, N, 5)
    Returns (total, cell_mean, ab_mean, multi_mean, point_mean)."""
    B, N, _ = cell_out.shape

    # ---- tile geometry (positions padded to TS*128 per tile) ---------------
    m0 = pl.cdiv(N, 128)                 # 128-wide rows needed
    n_tiles = pl.cdiv(m0, _TS_MAX)
    ts = pl.cdiv(m0, n_tiles)
    if n_tiles > 1:
        ts = pl.cdiv(ts, 8) * 8          # keep (8,128)-aligned block rows
    m = ts * n_tiles
    n_pad = m * 128

    def chan(x, pad_value):
        x = x.astype(jnp.float32)
        if n_pad != N:
            x = jnp.pad(x, ((0, 0), (0, n_pad - N)), constant_values=pad_value)
        return x

    # One fused channel-major pack.  Preds/points padded with 0.0 (harmless,
    # masked out); labels padded with -1.0 (ignored by every branch).
    packed = jnp.stack(
        [chan(cell_out[:, :, 0], 0.0),
         chan(ab_cell_out[:, :, 0], 0.0),
         chan(multi_out[:, :, 0], 0.0),
         chan(point[:, :, 0], 0.0),
         chan(point[:, :, 1], 0.0)]
        + [chan(labels[:, :, c], -1.0) for c in range(5)],
        axis=1,
    ).reshape(B, 10, m, 128)

    per_batch = pl.pallas_call(
        _lbp_loss_kernel,
        out_shape=jax.ShapeDtypeStruct((B, 1, 4), jnp.float32),
        grid_spec=pltpu.PrefetchScalarGridSpec(
            num_scalar_prefetch=0,
            grid=(B, n_tiles),
            in_specs=[pl.BlockSpec((1, 10, ts, 128),
                                   lambda b, n: (b, 0, n, 0))],
            out_specs=pl.BlockSpec((1, 1, 4), lambda b, n: (b, 0, 0)),
            scratch_shapes=[pltpu.VMEM((1, 1), jnp.float32)
                            for _ in range(8)],
        ),
        compiler_params=pltpu.CompilerParams(
            dimension_semantics=("parallel", "arbitrary")),
    )(packed)

    per_batch = per_batch.reshape(B, 4)
    cell_m = jnp.mean(per_batch[:, 0])
    ab_m = jnp.mean(per_batch[:, 1])
    multi_m = jnp.mean(per_batch[:, 2])
    pt_m = jnp.mean(per_batch[:, 3])
    total = 0.5 * cell_m + 5.0 * ab_m + 5.0 * multi_m + 1.0 * pt_m
    return total, cell_m, ab_m, multi_m, pt_m


def _reference(cell_out, ab_cell_out, multi_out, point, labels):
    """Pure-JAX transcription of the PyTorch forward (for a sanity check)."""
    def focal(pred, lab):
        pred = jnp.clip(pred, CLAMP_LO, CLAMP_HI)
        alpha = jnp.where(lab == 1.0, ALPHA, 1.0 - ALPHA)
        fw = jnp.where(lab == 1.0, 1.0 - pred, pred)
        ce = -(lab * jnp.log(pred) + (1.0 - lab) * jnp.log(1.0 - pred))
        loss = jnp.where(lab != -1.0, alpha * fw * fw * ce, 0.0)
        return jnp.sum(loss, axis=-1) / jnp.sum(lab > -1.0, axis=-1)

    cell_l = focal(cell_out[:, :, 0], labels[:, :, 0])
    ab_l = focal(ab_cell_out[:, :, 0], labels[:, :, 1])
    mu_l = focal(multi_out[:, :, 0], labels[:, :, 4])
    sel = labels[:, :, 1] == 1.0
    sq = jnp.sum((point - labels[:, :, 2:4]) ** 2, axis=-1)
    cnt = jnp.sum(sel, axis=-1)
    pt_l = jnp.where(cnt > 0,
                     jnp.sum(jnp.where(sel, sq, 0.0), axis=-1)
                     / jnp.maximum(2.0 * cnt, 1.0),
                     0.0)
    cm, am, mm, pm = cell_l.mean(), ab_l.mean(), mu_l.mean(), pt_l.mean()
    return 0.5 * cm + 5.0 * am + 5.0 * mm + pm, cm, am, mm, pm


if __name__ == "__main__":
    key = jax.random.PRNGKey(0)
    ks = jax.random.split(key, 8)
    B, N = 2, 16

    # Model outputs are treated as probabilities (the PyTorch module clamps
    # them directly, no sigmoid), so sample in (0, 1).
    cell_out = jax.random.uniform(ks[0], (B, N, 1), dtype=jnp.float32)
    ab_cell_out = jax.random.uniform(ks[1], (B, N, 1), dtype=jnp.float32)
    multi_out = jax.random.uniform(ks[2], (B, N, 1), dtype=jnp.float32)
    point = jax.random.uniform(ks[3], (B, N, 2), dtype=jnp.float32)

    # labels: col0 = cell label, col1 = abnormal-cell label,
    #         cols 2:4 = point targets, col4 = multi label.  {-1, 0, 1}.
    lab0 = jax.random.randint(ks[4], (B, N, 1), -1, 2).astype(jnp.float32)
    lab1 = jax.random.randint(ks[5], (B, N, 1), -1, 2).astype(jnp.float32)
    lab23 = jax.random.uniform(ks[6], (B, N, 2), dtype=jnp.float32)
    lab4 = jax.random.randint(ks[7], (B, N, 1), -1, 2).astype(jnp.float32)
    labels = jnp.concatenate([lab0, lab1, lab23, lab4], axis=-1)

    outs = jax.jit(lbp_loss)(cell_out, ab_cell_out, multi_out, point, labels)
    outs = jax.block_until_ready(outs)

    refs = _reference(cell_out, ab_cell_out, multi_out, point, labels)
    for got, want in zip(outs, refs):
        assert jnp.isfinite(got)
        assert jnp.allclose(got, want, rtol=1e-5, atol=1e-6), (got, want)

    print("KERNEL_OK")
</pallas_src>

<mosaic_0001>
module attributes {stable_mosaic.version = 11 : i64} {
  func.func @_lbp_loss_kernel(%arg0: i32, %arg1: i32, %arg2: memref<1x10x1x128xf32, #tpu.memory_space<vmem>>, %arg3: memref<1x1x4xf32, #tpu.memory_space<vmem>>, %arg4: memref<1x1xf32, #tpu.memory_space<vmem>>, %arg5: memref<1x1xf32, #tpu.memory_space<vmem>>, %arg6: memref<1x1xf32, #tpu.memory_space<vmem>>, %arg7: memref<1x1xf32, #tpu.memory_space<vmem>>, %arg8: memref<1x1xf32, #tpu.memory_space<vmem>>, %arg9: memref<1x1xf32, #tpu.memory_space<vmem>>, %arg10: memref<1x1xf32, #tpu.memory_space<vmem>>, %arg11: memref<1x1xf32, #tpu.memory_space<vmem>>) attributes {dimension_semantics = [#tpu.dimension_semantics<parallel>, #tpu.dimension_semantics<arbitrary>], iteration_bounds = array<i64: 2, 1>, scalar_prefetch = 0 : i64, scratch_operands = 8 : i64, tpu.core_type = #tpu.core_type<tc>, window_params = [{transform_indices = @transform_0, window_bounds = array<i64: 1, 10, 1, 128>}, {transform_indices = @transform_1, window_bounds = array<i64: 1, 1, 4>}]} {
    %c0_i32 = arith.constant 0 : i32
    %0 = arith.cmpi eq, %arg1, %c0_i32 : i32
    %1 = arith.extui %0 : i1 to i32
    %c0_i32_0 = arith.constant 0 : i32
    %2 = arith.cmpi ne, %1, %c0_i32_0 : i32
    scf.if %2 {
      %cst_107 = arith.constant 0.000000e+00 : f32
      %188 = vector.broadcast %cst_107 : f32 to vector<1x1xf32>
      %c0_108 = arith.constant 0 : index
      %c0_109 = arith.constant 0 : index
      %189 = vector.load %arg4[%c0_108, %c0_109] : memref<1x1xf32, #tpu.memory_space<vmem>>, vector<1x1xf32>
      tpu.vector_store %arg4[%c0_108, %c0_109], %188 {strides = array<i32>} : memref<1x1xf32, #tpu.memory_space<vmem>>, vector<1x1xf32>,
      %cst_110 = arith.constant 0.000000e+00 : f32
      %190 = vector.broadcast %cst_110 : f32 to vector<1x1xf32>
      %c0_111 = arith.constant 0 : index
      %c0_112 = arith.constant 0 : index
      %191 = vector.load %arg5[%c0_111, %c0_112] : memref<1x1xf32, #tpu.memory_space<vmem>>, vector<1x1xf32>
      tpu.vector_store %arg5[%c0_111, %c0_112], %190 {strides = array<i32>} : memref<1x1xf32, #tpu.memory_space<vmem>>, vector<1x1xf32>,
      %cst_113 = arith.constant 0.000000e+00 : f32
      %192 = vector.broadcast %cst_113 : f32 to vector<1x1xf32>
      %c0_114 = arith.constant 0 : index
      %c0_115 = arith.constant 0 : index
      %193 = vector.load %arg6[%c0_114, %c0_115] : memref<1x1xf32, #tpu.memory_space<vmem>>, vector<1x1xf32>
      tpu.vector_store %arg6[%c0_114, %c0_115], %192 {strides = array<i32>} : memref<1x1xf32, #tpu.memory_space<vmem>>, vector<1x1xf32>,
      %cst_116 = arith.constant 0.000000e+00 : f32
      %194 = vector.broadcast %cst_116 : f32 to vector<1x1xf32>
      %c0_117 = arith.constant 0 : index
      %c0_118 = arith.constant 0 : index
      %195 = vector.load %arg7[%c0_117, %c0_118] : memref<1x1xf32, #tpu.memory_space<vmem>>, vector<1x1xf32>
      tpu.vector_store %arg7[%c0_117, %c0_118], %194 {strides = array<i32>} : memref<1x1xf32, #tpu.memory_space<vmem>>, vector<1x1xf32>,
      %cst_119 = arith.constant 0.000000e+00 : f32
      %196 = vector.broadcast %cst_119 : f32 to vector<1x1xf32>
      %c0_120 = arith.constant 0 : index
      %c0_121 = arith.constant 0 : index
      %197 = vector.load %arg8[%c0_120, %c0_121] : memref<1x1xf32, #tpu.memory_space<vmem>>, vector<1x1xf32>
      tpu.vector_store %arg8[%c0_120, %c0_121], %196 {strides = array<i32>} : memref<1x1xf32, #tpu.memory_space<vmem>>, vector<1x1xf32>,
      %cst_122 = arith.constant 0.000000e+00 : f32
      %198 = vector.broadcast %cst_122 : f32 to vector<1x1xf32>
      %c0_123 = arith.constant 0 : index
      %c0_124 = arith.constant 0 : index
      %199 = vector.load %arg9[%c0_123, %c0_124] : memref<1x1xf32, #tpu.memory_space<vmem>>, vector<1x1xf32>
      tpu.vector_store %arg9[%c0_123, %c0_124], %198 {strides = array<i32>} : memref<1x1xf32, #tpu.memory_space<vmem>>, vector<1x1xf32>,
      %cst_125 = arith.constant 0.000000e+00 : f32
      %200 = vector.broadcast %cst_125 : f32 to vector<1x1xf32>
      %c0_126 = arith.constant 0 : index
      %c0_127 = arith.constant 0 : index
      %201 = vector.load %arg10[%c0_126, %c0_127] : memref<1x1xf32, #tpu.memory_space<vmem>>, vector<1x1xf32>
      tpu.vector_store %arg10[%c0_126, %c0_127], %200 {strides = array<i32>} : memref<1x1xf32, #tpu.memory_space<vmem>>, vector<1x1xf32>,
      %cst_128 = arith.constant 0.000000e+00 : f32
      %202 = vector.broadcast %cst_128 : f32 to vector<1x1xf32>
      %c0_129 = arith.constant 0 : index
      %c0_130 = arith.constant 0 : index
      %203 = vector.load %arg11[%c0_129, %c0_130] : memref<1x1xf32, #tpu.memory_space<vmem>>, vector<1x1xf32>
      tpu.vector_store %arg11[%c0_129, %c0_130], %202 {strides = array<i32>} : memref<1x1xf32, #tpu.memory_space<vmem>>, vector<1x1xf32>,
    } else {
    }
    %c0 = arith.constant 0 : index
    %c0_1 = arith.constant 0 : index
    %c0_2 = arith.constant 0 : index
    %c0_3 = arith.constant 0 : index
    %3 = vector.load %arg2[%c0, %c0_1, %c0_2, %c0_3] : memref<1x10x1x128xf32, #tpu.memory_space<vmem>>, vector<1x1x1x128xf32>
    %4 = vector.shape_cast %3 : vector<1x1x1x128xf32> to vector<1x128xf32>
    %c0_4 = arith.constant 0 : index
    %c1 = arith.constant 1 : index
    %c0_5 = arith.constant 0 : index
    %c0_6 = arith.constant 0 : index
    %5 = vector.load %arg2[%c0_4, %c1, %c0_5, %c0_6] : memref<1x10x1x128xf32, #tpu.memory_space<vmem>>, vector<1x1x1x128xf32>
    %6 = vector.shape_cast %5 : vector<1x1x1x128xf32> to vector<1x128xf32>
    %c0_7 = arith.constant 0 : index
    %c2 = arith.constant 2 : index
    %c0_8 = arith.constant 0 : index
    %c0_9 = arith.constant 0 : index
    %7 = vector.load %arg2[%c0_7, %c2, %c0_8, %c0_9] : memref<1x10x1x128xf32, #tpu.memory_space<vmem>>, vector<1x1x1x128xf32>
    %8 = vector.shape_cast %7 : vector<1x1x1x128xf32> to vector<1x128xf32>
    %c0_10 = arith.constant 0 : index
    %c3 = arith.constant 3 : index
    %c0_11 = arith.constant 0 : index
    %c0_12 = arith.constant 0 : index
    %9 = vector.load %arg2[%c0_10, %c3, %c0_11, %c0_12] : memref<1x10x1x128xf32, #tpu.memory_space<vmem>>, vector<1x1x1x128xf32>
    %10 = vector.shape_cast %9 : vector<1x1x1x128xf32> to vector<1x128xf32>
    %c0_13 = arith.constant 0 : index
    %c4 = arith.constant 4 : index
    %c0_14 = arith.constant 0 : index
    %c0_15 = arith.constant 0 : index
    %11 = vector.load %arg2[%c0_13, %c4, %c0_14, %c0_15] : memref<1x10x1x128xf32, #tpu.memory_space<vmem>>, vector<1x1x1x128xf32>
    %12 = vector.shape_cast %11 : vector<1x1x1x128xf32> to vector<1x128xf32>
    %c0_16 = arith.constant 0 : index
    %c5 = arith.constant 5 : index
    %c0_17 = arith.constant 0 : index
    %c0_18 = arith.constant 0 : index
    %13 = vector.load %arg2[%c0_16, %c5, %c0_17, %c0_18] : memref<1x10x1x128xf32, #tpu.memory_space<vmem>>, vector<1x1x1x128xf32>
    %14 = vector.shape_cast %13 : vector<1x1x1x128xf32> to vector<1x128xf32>
    %c0_19 = arith.constant 0 : index
    %c6 = arith.constant 6 : index
    %c0_20 = arith.constant 0 : index
    %c0_21 = arith.constant 0 : index
    %15 = vector.load %arg2[%c0_19, %c6, %c0_20, %c0_21] : memref<1x10x1x128xf32, #tpu.memory_space<vmem>>, vector<1x1x1x128xf32>
    %16 = vector.shape_cast %15 : vector<1x1x1x128xf32> to vector<1x128xf32>
    %c0_22 = arith.constant 0 : index
    %c7 = arith.constant 7 : index
    %c0_23 = arith.constant 0 : index
    %c0_24 = arith.constant 0 : index
    %17 = vector.load %arg2[%c0_22, %c7, %c0_23, %c0_24] : memref<1x10x1x128xf32, #tpu.memory_space<vmem>>, vector<1x1x1x128xf32>
    %18 = vector.shape_cast %17 : vector<1x1x1x128xf32> to vector<1x128xf32>
    %c0_25 = arith.constant 0 : index
    %c8 = arith.constant 8 : index
    %c0_26 = arith.constant 0 : index
    %c0_27 = arith.constant 0 : index
    %19 = vector.load %arg2[%c0_25, %c8, %c0_26, %c0_27] : memref<1x10x1x128xf32, #tpu.memory_space<vmem>>, vector<1x1x1x128xf32>
    %20 = vector.shape_cast %19 : vector<1x1x1x128xf32> to vector<1x128xf32>
    %c0_28 = arith.constant 0 : index
    %c9 = arith.constant 9 : index
    %c0_29 = arith.constant 0 : index
    %c0_30 = arith.constant 0 : index
    %21 = vector.load %arg2[%c0_28, %c9, %c0_29, %c0_30] : memref<1x10x1x128xf32, #tpu.memory_space<vmem>>, vector<1x1x1x128xf32>
    %22 = vector.shape_cast %21 : vector<1x1x1x128xf32> to vector<1x128xf32>
    %cst = arith.constant 3.000000e-04 : f32
    %cst_31 = arith.constant 9.997000e-01 : f32
    %23 = vector.broadcast %cst : f32 to vector<1x128xf32>
    %24 = arith.maximumf %23, %4 : vector<1x128xf32>
    %25 = vector.broadcast %cst_31 : f32 to vector<1x128xf32>
    %26 = arith.minimumf %25, %24 : vector<1x128xf32>
    %cst_32 = arith.constant 1.000000e+00 : f32
    %27 = vector.broadcast %cst_32 : f32 to vector<1x128xf32>
    %28 = arith.cmpf oeq, %14, %27 : vector<1x128xf32>
    %cst_33 = arith.constant 2.500000e-01 : f32
    %cst_34 = arith.constant 7.500000e-01 : f32
    %29 = vector.broadcast %cst_33 : f32 to vector<1x128xf32>
    %30 = vector.broadcast %cst_34 : f32 to vector<1x128xf32>
    %31 = arith.select %28, %29, %30 : vector<1x128xi1>, vector<1x128xf32>
    %cst_35 = arith.constant 1.000000e+00 : f32
    %32 = vector.broadcast %cst_35 : f32 to vector<1x128xf32>
    %33 = arith.subf %32, %26 : vector<1x128xf32>
    %34 = arith.select %28, %33, %26 : vector<1x128xi1>, vector<1x128xf32>
    %cst_36 = arith.constant 1.000000e+00 : f32
    %35 = vector.broadcast %cst_36 : f32 to vector<1x128xf32>
    %36 = arith.subf %35, %26 : vector<1x128xf32>
    %37 = arith.select %28, %26, %36 : vector<1x128xi1>, vector<1x128xf32>
    %38 = math.log %37 : vector<1x128xf32>
    %cst_37 = arith.constant 0.000000e+00 : f32
    %39 = vector.broadcast %cst_37 : f32 to vector<1x128xf32>
    %40 = arith.subf %39, %38 : vector<1x128xf32>
    %cst_38 = arith.constant -1.000000e+00 : f32
    %41 = vector.broadcast %cst_38 : f32 to vector<1x128xf32>
    %42 = arith.cmpf one, %14, %41 : vector<1x128xf32>
    %43 = arith.mulf %34, %34 : vector<1x128xf32>
    %44 = arith.mulf %31, %43 : vector<1x128xf32>
    %45 = arith.mulf %44, %40 : vector<1x128xf32>
    %cst_39 = arith.constant 0.000000e+00 : f32
    %46 = vector.broadcast %cst_39 : f32 to vector<1x128xf32>
    %47 = arith.select %42, %45, %46 : vector<1x128xi1>, vector<1x128xf32>
    %48 = vector.shape_cast %47 : vector<1x128xf32> to vector<1x1x128xf32>
    %cst_40 = arith.constant dense<0.000000e+00> : vector<1xf32>
    %49 = vector.multi_reduction <add>, %48, %cst_40 [1, 2] : vector<1x1x128xf32> to vector<1xf32>
    %50 = vector.shape_cast %49 : vector<1xf32> to vector<1x1x1xf32>
    %51 = vector.extract %50[0, 0, 0] : f32 from vector<1x1x1xf32>
    %52 = vector.broadcast %51 : f32 to vector<1x1xf32>
    %cst_41 = arith.constant -1.000000e+00 : f32
    %53 = vector.broadcast %cst_41 : f32 to vector<1x128xf32>
    %54 = arith.cmpf ogt, %14, %53 : vector<1x128xf32>
    %55 = arith.extui %54 : vector<1x128xi1> to vector<1x128xi32>
    %56 = arith.sitofp %55 : vector<1x128xi32> to vector<1x128xf32>
    %57 = vector.shape_cast %56 : vector<1x128xf32> to vector<1x1x128xf32>
    %cst_42 = arith.constant dense<0.000000e+00> : vector<1xf32>
    %58 = vector.multi_reduction <add>, %57, %cst_42 [1, 2] : vector<1x1x128xf32> to vector<1xf32>
    %59 = vector.shape_cast %58 : vector<1xf32> to vector<1x1x1xf32>
    %60 = vector.extract %59[0, 0, 0] : f32 from vector<1x1x1xf32>
    %61 = vector.broadcast %60 : f32 to vector<1x1xf32>
    %c0_43 = arith.constant 0 : index
    %c0_44 = arith.constant 0 : index
    %62 = vector.load %arg4[%c0_43, %c0_44] : memref<1x1xf32, #tpu.memory_space<vmem>>, vector<1x1xf32>
    %63 = arith.addf %62, %52 : vector<1x1xf32>
    %c0_45 = arith.constant 0 : index
    %c0_46 = arith.constant 0 : index
    %64 = vector.load %arg4[%c0_45, %c0_46] : memref<1x1xf32, #tpu.memory_space<vmem>>, vector<1x1xf32>
    tpu.vector_store %arg4[%c0_45, %c0_46], %63 {strides = array<i32>} : memref<1x1xf32, #tpu.memory_space<vmem>>, vector<1x1xf32>,
    %c0_47 = arith.constant 0 : index
    %c0_48 = arith.constant 0 : index
    %65 = vector.load %arg5[%c0_47, %c0_48] : memref<1x1xf32, #tpu.memory_space<vmem>>, vector<1x1xf32>
    %66 = arith.addf %65, %61 : vector<1x1xf32>
    %c0_49 = arith.constant 0 : index
    %c0_50 = arith.constant 0 : index
    %67 = vector.load %arg5[%c0_49, %c0_50] : memref<1x1xf32, #tpu.memory_space<vmem>>, vector<1x1xf32>
    tpu.vector_store %arg5[%c0_49, %c0_50], %66 {strides = array<i32>} : memref<1x1xf32, #tpu.memory_space<vmem>>, vector<1x1xf32>,
    %cst_51 = arith.constant 3.000000e-04 : f32
    %cst_52 = arith.constant 9.997000e-01 : f32
    %68 = vector.broadcast %cst_51 : f32 to vector<1x128xf32>
    %69 = arith.maximumf %68, %6 : vector<1x128xf32>
    %70 = vector.broadcast %cst_52 : f32 to vector<1x128xf32>
    %71 = arith.minimumf %70, %69 : vector<1x128xf32>
    %cst_53 = arith.constant 1.000000e+00 : f32
    %72 = vector.broadcast %cst_53 : f32 to vector<1x128xf32>
    %73 = arith.cmpf oeq, %16, %72 : vector<1x128xf32>
    %cst_54 = arith.constant 2.500000e-01 : f32
    %cst_55 = arith.constant 7.500000e-01 : f32
    %74 = vector.broadcast %cst_54 : f32 to vector<1x128xf32>
    %75 = vector.broadcast %cst_55 : f32 to vector<1x128xf32>
    %76 = arith.select %73, %74, %75 : vector<1x128xi1>, vector<1x128xf32>
    %cst_56 = arith.constant 1.000000e+00 : f32
    %77 = vector.broadcast %cst_56 : f32 to vector<1x128xf32>
    %78 = arith.subf %77, %71 : vector<1x128xf32>
    %79 = arith.select %73, %78, %71 : vector<1x128xi1>, vector<1x128xf32>
    %cst_57 = arith.constant 1.000000e+00 : f32
    %80 = vector.broadcast %cst_57 : f32 to vector<1x128xf32>
    %81 = arith.subf %80, %71 : vector<1x128xf32>
    %82 = arith.select %73, %71, %81 : vector<1x128xi1>, vector<1x128xf32>
    %83 = math.log %82 : vector<1x128xf32>
    %cst_58 = arith.constant 0.000000e+00 : f32
    %84 = vector.broadcast %cst_58 : f32 to vector<1x128xf32>
    %85 = arith.subf %84, %83 : vector<1x128xf32>
    %cst_59 = arith.constant -1.000000e+00 : f32
    %86 = vector.broadcast %cst_59 : f32 to vector<1x128xf32>
    %87 = arith.cmpf one, %16, %86 : vector<1x128xf32>
    %88 = arith.mulf %79, %79 : vector<1x128xf32>
    %89 = arith.mulf %76, %88 : vector<1x128xf32>
    %90 = arith.mulf %89, %85 : vector<1x128xf32>
    %cst_60 = arith.constant 0.000000e+00 : f32
    %91 = vector.broadcast %cst_60 : f32 to vector<1x128xf32>
    %92 = arith.select %87, %90, %91 : vector<1x128xi1>, vector<1x128xf32>
    %93 = vector.shape_cast %92 : vector<1x128xf32> to vector<1x1x128xf32>
    %cst_61 = arith.constant dense<0.000000e+00> : vector<1xf32>
    %94 = vector.multi_reduction <add>, %93, %cst_61 [1, 2] : vector<1x1x128xf32> to vector<1xf32>
    %95 = vector.shape_cast %94 : vector<1xf32> to vector<1x1x1xf32>
    %96 = vector.extract %95[0, 0, 0] : f32 from vector<1x1x1xf32>
    %97 = vector.broadcast %96 : f32 to vector<1x1xf32>
    %cst_62 = arith.constant -1.000000e+00 : f32
    %98 = vector.broadcast %cst_62 : f32 to vector<1x128xf32>
    %99 = arith.cmpf ogt, %16, %98 : vector<1x128xf32>
    %100 = arith.extui %99 : vector<1x128xi1> to vector<1x128xi32>
    %101 = arith.sitofp %100 : vector<1x128xi32> to vector<1x128xf32>
    %102 = vector.shape_cast %101 : vector<1x128xf32> to vector<1x1x128xf32>
    %cst_63 = arith.constant dense<0.000000e+00> : vector<1xf32>
    %103 = vector.multi_reduction <add>, %102, %cst_63 [1, 2] : vector<1x1x128xf32> to vector<1xf32>
    %104 = vector.shape_cast %103 : vector<1xf32> to vector<1x1x1xf32>
    %105 = vector.extract %104[0, 0, 0] : f32 from vector<1x1x1xf32>
    %106 = vector.broadcast %105 : f32 to vector<1x1xf32>
    %c0_64 = arith.constant 0 : index
    %c0_65 = arith.constant 0 : index
    %107 = vector.load %arg6[%c0_64, %c0_65] : memref<1x1xf32, #tpu.memory_space<vmem>>, vector<1x1xf32>
    %108 = arith.addf %107, %97 : vector<1x1xf32>
    %c0_66 = arith.constant 0 : index
    %c0_67 = arith.constant 0 : index
    %109 = vector.load %arg6[%c0_66, %c0_67] : memref<1x1xf32, #tpu.memory_space<vmem>>, vector<1x1xf32>
    tpu.vector_store %arg6[%c0_66, %c0_67], %108 {strides = array<i32>} : memref<1x1xf32, #tpu.memory_space<vmem>>, vector<1x1xf32>,
    %c0_68 = arith.constant 0 : index
    %c0_69 = arith.constant 0 : index
    %110 = vector.load %arg7[%c0_68, %c0_69] : memref<1x1xf32, #tpu.memory_space<vmem>>, vector<1x1xf32>
    %111 = arith.addf %110, %106 : vector<1x1xf32>
    %c0_70 = arith.constant 0 : index
    %c0_71 = arith.constant 0 : index
    %112 = vector.load %arg7[%c0_70, %c0_71] : memref<1x1xf32, #tpu.memory_space<vmem>>, vector<1x1xf32>
    tpu.vector_store %arg7[%c0_70, %c0_71], %111 {strides = array<i32>} : memref<1x1xf32, #tpu.memory_space<vmem>>, vector<1x1xf32>,
    %cst_72 = arith.constant 3.000000e-04 : f32
    %cst_73 = arith.constant 9.997000e-01 : f32
    %113 = vector.broadcast %cst_72 : f32 to vector<1x128xf32>
    %114 = arith.maximumf %113, %8 : vector<1x128xf32>
    %115 = vector.broadcast %cst_73 : f32 to vector<1x128xf32>
    %116 = arith.minimumf %115, %114 : vector<1x128xf32>
    %cst_74 = arith.constant 1.000000e+00 : f32
    %117 = vector.broadcast %cst_74 : f32 to vector<1x128xf32>
    %118 = arith.cmpf oeq, %22, %117 : vector<1x128xf32>
    %cst_75 = arith.constant 2.500000e-01 : f32
    %cst_76 = arith.constant 7.500000e-01 : f32
    %119 = vector.broadcast %cst_75 : f32 to vector<1x128xf32>
    %120 = vector.broadcast %cst_76 : f32 to vector<1x128xf32>
    %121 = arith.select %118, %119, %120 : vector<1x128xi1>, vector<1x128xf32>
    %cst_77 = arith.constant 1.000000e+00 : f32
    %122 = vector.broadcast %cst_77 : f32 to vector<1x128xf32>
    %123 = arith.subf %122, %116 : vector<1x128xf32>
    %124 = arith.select %118, %123, %116 : vector<1x128xi1>, vector<1x128xf32>
    %cst_78 = arith.constant 1.000000e+00 : f32
    %125 = vector.broadcast %cst_78 : f32 to vector<1x128xf32>
    %126 = arith.subf %125, %116 : vector<1x128xf32>
    %127 = arith.select %118, %116, %126 : vector<1x128xi1>, vector<1x128xf32>
    %128 = math.log %127 : vector<1x128xf32>
    %cst_79 = arith.constant 0.000000e+00 : f32
    %129 = vector.broadcast %cst_79 : f32 to vector<1x128xf32>
    %130 = arith.subf %129, %128 : vector<1x128xf32>
    %cst_80 = arith.constant -1.000000e+00 : f32
    %131 = vector.broadcast %cst_80 : f32 to vector<1x128xf32>
    %132 = arith.cmpf one, %22, %131 : vector<1x128xf32>
    %133 = arith.mulf %124, %124 : vector<1x128xf32>
    %134 = arith.mulf %121, %133 : vector<1x128xf32>
    %135 = arith.mulf %134, %130 : vector<1x128xf32>
    %cst_81 = arith.constant 0.000000e+00 : f32
    %136 = vector.broadcast %cst_81 : f32 to vector<1x128xf32>
    %137 = arith.select %132, %135, %136 : vector<1x128xi1>, vector<1x128xf32>
    %138 = vector.shape_cast %137 : vector<1x128xf32> to vector<1x1x128xf32>
    %cst_82 = arith.constant dense<0.000000e+00> : vector<1xf32>
    %139 = vector.multi_reduction <add>, %138, %cst_82 [1, 2] : vector<1x1x128xf32> to vector<1xf32>
    %140 = vector.shape_cast %139 : vector<1xf32> to vector<1x1x1xf32>
    %141 = vector.extract %140[0, 0, 0] : f32 from vector<1x1x1xf32>
    %142 = vector.broadcast %141 : f32 to vector<1x1xf32>
    %cst_83 = arith.constant -1.000000e+00 : f32
    %143 = vector.broadcast %cst_83 : f32 to vector<1x128xf32>
    %144 = arith.cmpf ogt, %22, %143 : vector<1x128xf32>
    %145 = arith.extui %144 : vector<1x128xi1> to vector<1x128xi32>
    %146 = arith.sitofp %145 : vector<1x128xi32> to vector<1x128xf32>
    %147 = vector.shape_cast %146 : vector<1x128xf32> to vector<1x1x128xf32>
    %cst_84 = arith.constant dense<0.000000e+00> : vector<1xf32>
    %148 = vector.multi_reduction <add>, %147, %cst_84 [1, 2] : vector<1x1x128xf32> to vector<1xf32>
    %149 = vector.shape_cast %148 : vector<1xf32> to vector<1x1x1xf32>
    %150 = vector.extract %149[0, 0, 0] : f32 from vector<1x1x1xf32>
    %151 = vector.broadcast %150 : f32 to vector<1x1xf32>
    %c0_85 = arith.constant 0 : index
    %c0_86 = arith.constant 0 : index
    %152 = vector.load %arg8[%c0_85, %c0_86] : memref<1x1xf32, #tpu.memory_space<vmem>>, vector<1x1xf32>
    %153 = arith.addf %152, %142 : vector<1x1xf32>
    %c0_87 = arith.constant 0 : index
    %c0_88 = arith.constant 0 : index
    %154 = vector.load %arg8[%c0_87, %c0_88] : memref<1x1xf32, #tpu.memory_space<vmem>>, vector<1x1xf32>
    tpu.vector_store %arg8[%c0_87, %c0_88], %153 {strides = array<i32>} : memref<1x1xf32, #tpu.memory_space<vmem>>, vector<1x1xf32>,
    %c0_89 = arith.constant 0 : index
    %c0_90 = arith.constant 0 : index
    %155 = vector.load %arg9[%c0_89, %c0_90] : memref<1x1xf32, #tpu.memory_space<vmem>>, vector<1x1xf32>
    %156 = arith.addf %155, %151 : vector<1x1xf32>
    %c0_91 = arith.constant 0 : index
    %c0_92 = arith.constant 0 : index
    %157 = vector.load %arg9[%c0_91, %c0_92] : memref<1x1xf32, #tpu.memory_space<vmem>>, vector<1x1xf32>
    tpu.vector_store %arg9[%c0_91, %c0_92], %156 {strides = array<i32>} : memref<1x1xf32, #tpu.memory_space<vmem>>, vector<1x1xf32>,
    %cst_93 = arith.constant 1.000000e+00 : f32
    %158 = vector.broadcast %cst_93 : f32 to vector<1x128xf32>
    %159 = arith.cmpf oeq, %16, %158 : vector<1x128xf32>
    %160 = arith.subf %10, %18 : vector<1x128xf32>
    %161 = arith.subf %12, %20 : vector<1x128xf32>
    %c0_94 = arith.constant 0 : index
    %c0_95 = arith.constant 0 : index
    %162 = vector.load %arg10[%c0_94, %c0_95] : memref<1x1xf32, #tpu.memory_space<vmem>>, vector<1x1xf32>
    %163 = arith.mulf %160, %160 : vector<1x128xf32>
    %164 = arith.mulf %161, %161 : vector<1x128xf32>
    %165 = arith.addf %163, %164 : vector<1x128xf32>
    %cst_96 = arith.constant 0.000000e+00 : f32
    %166 = vector.broadcast %cst_96 : f32 to vector<1x128xf32>
    %167 = arith.select %159, %165, %166 : vector<1x128xi1>, vector<1x128xf32>
    %168 = vector.shape_cast %167 : vector<1x128xf32> to vector<1x1x128xf32>
    %cst_97 = arith.constant dense<0.000000e+00> : vector<1xf32>
    %169 = vector.multi_reduction <add>, %168, %cst_97 [1, 2] : vector<1x1x128xf32> to vector<1xf32>
    %170 = vector.shape_cast %169 : vector<1xf32> to vector<1x1x1xf32>
    %171 = vector.extract %170[0, 0, 0] : f32 from vector<1x1x1xf32>
    %172 = vector.broadcast %171 : f32 to vector<1x1xf32>
    %173 = arith.addf %162, %172 : vector<1x1xf32>
    %c0_98 = arith.constant 0 : index
    %c0_99 = arith.constant 0 : index
    %174 = vector.load %arg10[%c0_98, %c0_99] : memref<1x1xf32, #tpu.memory_space<vmem>>, vector<1x1xf32>
    tpu.vector_store %arg10[%c0_98, %c0_99], %173 {strides = array<i32>} : memref<1x1xf32, #tpu.memory_space<vmem>>, vector<1x1xf32>,
    %c0_100 = arith.constant 0 : index
    %c0_101 = arith.constant 0 : index
    %175 = vector.load %arg11[%c0_100, %c0_101] : memref<1x1xf32, #tpu.memory_space<vmem>>, vector<1x1xf32>
    %176 = arith.extui %159 : vector<1x128xi1> to vector<1x128xi32>
    %177 = arith.sitofp %176 : vector<1x128xi32> to vector<1x128xf32>
    %178 = vector.shape_cast %177 : vector<1x128xf32> to vector<1x1x128xf32>
    %cst_102 = arith.constant dense<0.000000e+00> : vector<1xf32>
    %179 = vector.multi_reduction <add>, %178, %cst_102 [1, 2] : vector<1x1x128xf32> to vector<1xf32>
    %180 = vector.shape_cast %179 : vector<1xf32> to vector<1x1x1xf32>
    %181 = vector.extract %180[0, 0, 0] : f32 from vector<1x1x1xf32>
    %182 = vector.broadcast %181 : f32 to vector<1x1xf32>
    %183 = arith.addf %175, %182 : vector<1x1xf32>
    %c0_103 = arith.constant 0 : index
    %c0_104 = arith.constant 0 : index
    %184 = vector.load %arg11[%c0_103, %c0_104] : memref<1x1xf32, #tpu.memory_space<vmem>>, vector<1x1xf32>
    tpu.vector_store %arg11[%c0_103, %c0_104], %183 {strides = array<i32>} : memref<1x1xf32, #tpu.memory_space<vmem>>, vector<1x1xf32>,
    %c0_i32_105 = arith.constant 0 : i32
    %185 = arith.cmpi eq, %arg1, %c0_i32_105 : i32
    %186 = arith.extui %185 : i1 to i32
    %c0_i32_106 = arith.constant 0 : i32
    %187 = arith.cmpi ne, %186, %c0_i32_106 : i32
    scf.if %187 {
      %c0_107 = arith.constant 0 : index
      %c0_108 = arith.constant 0 : index
      %188 = vector.load %arg4[%c0_107, %c0_108] : memref<1x1xf32, #tpu.memory_space<vmem>>, vector<1x1xf32>
      %c0_109 = arith.constant 0 : index
      %c0_110 = arith.constant 0 : index
      %189 = vector.load %arg5[%c0_109, %c0_110] : memref<1x1xf32, #tpu.memory_space<vmem>>, vector<1x1xf32>
      %cst_111 = arith.constant 1.000000e+00 : f32
      %190 = vector.broadcast %cst_111 : f32 to vector<1x1xf32>
      %191 = arith.maximumf %189, %190 : vector<1x1xf32>
      %192 = arith.divf %188, %191 : vector<1x1xf32>
      %c0_112 = arith.constant 0 : index
      %c0_113 = arith.constant 0 : index
      %193 = vector.load %arg6[%c0_112, %c0_113] : memref<1x1xf32, #tpu.memory_space<vmem>>, vector<1x1xf32>
      %c0_114 = arith.constant 0 : index
      %c0_115 = arith.constant 0 : index
      %194 = vector.load %arg7[%c0_114, %c0_115] : memref<1x1xf32, #tpu.memory_space<vmem>>, vector<1x1xf32>
      %cst_116 = arith.constant 1.000000e+00 : f32
      %195 = vector.broadcast %cst_116 : f32 to vector<1x1xf32>
      %196 = arith.maximumf %194, %195 : vector<1x1xf32>
      %197 = arith.divf %193, %196 : vector<1x1xf32>
      %c0_117 = arith.constant 0 : index
      %c0_118 = arith.constant 0 : index
      %198 = vector.load %arg8[%c0_117, %c0_118] : memref<1x1xf32, #tpu.memory_space<vmem>>, vector<1x1xf32>
      %c0_119 = arith.constant 0 : index
      %c0_120 = arith.constant 0 : index
      %199 = vector.load %arg9[%c0_119, %c0_120] : memref<1x1xf32, #tpu.memory_space<vmem>>, vector<1x1xf32>
      %cst_121 = arith.constant 1.000000e+00 : f32
      %200 = vector.broadcast %cst_121 : f32 to vector<1x1xf32>
      %201 = arith.maximumf %199, %200 : vector<1x1xf32>
      %202 = arith.divf %198, %201 : vector<1x1xf32>
      %c0_122 = arith.constant 0 : index
      %c0_123 = arith.constant 0 : index
      %203 = vector.load %arg10[%c0_122, %c0_123] : memref<1x1xf32, #tpu.memory_space<vmem>>, vector<1x1xf32>
      %c0_124 = arith.constant 0 : index
      %c0_125 = arith.constant 0 : index
      %204 = vector.load %arg11[%c0_124, %c0_125] : memref<1x1xf32, #tpu.memory_space<vmem>>, vector<1x1xf32>
      %cst_126 = arith.constant 2.000000e+00 : f32
      %205 = vector.broadcast %cst_126 : f32 to vector<1x1xf32>
      %206 = arith.mulf %205, %204 : vector<1x1xf32>
      %cst_127 = arith.constant 1.000000e+00 : f32
      %207 = vector.broadcast %cst_127 : f32 to vector<1x1xf32>
      %208 = arith.maximumf %206, %207 : vector<1x1xf32>
      %209 = arith.divf %203, %208 : vector<1x1xf32>
      %210 = tpu.iota {dimensions = array<i32: 1>} : vector<1x4xi32>
      %c0_i32_128 = arith.constant 0 : i32
      %211 = vector.broadcast %c0_i32_128 : i32 to vector<1x4xi32>
      %212 = arith.cmpi eq, %210, %211 : vector<1x4xi32>
      %cst_129 = arith.constant 0.000000e+00 : f32
      %213 = vector.shape_cast %192 : vector<1x1xf32> to vector<1x1xf32>
      %214 = vector.broadcast %213 : vector<1x1xf32> to vector<1x4xf32>
      %215 = vector.broadcast %cst_129 : f32 to vector<1x4xf32>
      %216 = arith.select %212, %214, %215 : vector<1x4xi1>, vector<1x4xf32>
      %c1_i32 = arith.constant 1 : i32
      %217 = vector.broadcast %c1_i32 : i32 to vector<1x4xi32>
      %218 = arith.cmpi eq, %210, %217 : vector<1x4xi32>
      %cst_130 = arith.constant 0.000000e+00 : f32
      %219 = vector.shape_cast %197 : vector<1x1xf32> to vector<1x1xf32>
      %220 = vector.broadcast %219 : vector<1x1xf32> to vector<1x4xf32>
      %221 = vector.broadcast %cst_130 : f32 to vector<1x4xf32>
      %222 = arith.select %218, %220, %221 : vector<1x4xi1>, vector<1x4xf32>
      %223 = arith.addf %216, %222 : vector<1x4xf32>
      %c2_i32 = arith.constant 2 : i32
      %224 = vector.broadcast %c2_i32 : i32 to vector<1x4xi32>
      %225 = arith.cmpi eq, %210, %224 : vector<1x4xi32>
      %cst_131 = arith.constant 0.000000e+00 : f32
      %226 = vector.shape_cast %202 : vector<1x1xf32> to vector<1x1xf32>
      %227 = vector.broadcast %226 : vector<1x1xf32> to vector<1x4xf32>
      %228 = vector.broadcast %cst_131 : f32 to vector<1x4xf32>
      %229 = arith.select %225, %227, %228 : vector<1x4xi1>, vector<1x4xf32>
      %230 = arith.addf %223, %229 : vector<1x4xf32>
      %c3_i32 = arith.constant 3 : i32
      %231 = vector.broadcast %c3_i32 : i32 to vector<1x4xi32>
      %232 = arith.cmpi eq, %210, %231 : vector<1x4xi32>
      %cst_132 = arith.constant 0.000000e+00 : f32
      %233 = vector.shape_cast %209 : vector<1x1xf32> to vector<1x1xf32>
      %234 = vector.broadcast %233 : vector<1x1xf32> to vector<1x4xf32>
      %235 = vector.broadcast %cst_132 : f32 to vector<1x4xf32>
      %236 = arith.select %232, %234, %235 : vector<1x4xi1>, vector<1x4xf32>
      %237 = arith.addf %230, %236 : vector<1x4xf32>
      %c0_133 = arith.constant 0 : index
      %c0_134 = arith.constant 0 : index
      %c0_135 = arith.constant 0 : index
      %238 = vector.load %arg3[%c0_133, %c0_134, %c0_135] : memref<1x1x4xf32, #tpu.memory_space<vmem>>, vector<1x1x4xf32>
      %239 = vector.shape_cast %238 : vector<1x1x4xf32> to vector<1x4xf32>
      %240 = vector.shape_cast %237 : vector<1x4xf32> to vector<1x1x4xf32>
      tpu.vector_store %arg3[%c0_133, %c0_134, %c0_135], %240 {strides = array<i32>} : memref<1x1x4xf32, #tpu.memory_space<vmem>>, vector<1x1x4xf32>,
    } else {
    }
    return
  }
  func.func @transform_0(%arg0: i32, %arg1: i32) -> (i32, i32, i32, i32) {
    %c0_i32 = arith.constant 0 : i32
    %c0_i32_0 = arith.constant 0 : i32
    %c0_i32_1 = arith.constant 0 : i32
    return %arg0, %c0_i32, %arg1, %c0_i32_0 : i32, i32, i32, i32
  }
  func.func @transform_1(%arg0: i32, %arg1: i32) -> (i32, i32, i32) {
    %c0_i32 = arith.constant 0 : i32
    %c0_i32_0 = arith.constant 0 : i32
    %c0_i32_1 = arith.constant 0 : i32
    return %arg0, %c0_i32, %c0_i32_0 : i32, i32, i32
  }
}

</mosaic_0001>

<llo_original>
// kernel: lbp_loss.1
$region0: #{lbp_loss.1}
  #allocation0 [shape = 'u32[]', space=smem, size = 0x4, offset = 0x4, fixed_abs, tag = 'smem constant byte address 0x4 - core index']
  #allocation1 [shape = 'u32[144,128]{1,0:T(1,128)}', space=vmem, size = 0x12000, scoped, tag = 'internal scratch']
  #allocation2 [shape = 'f32[1,1]{1,0:T(1,128)}', space=vmem, size = 0x200, scoped, tag = 'scratch operand']
  #allocation3 [shape = 'f32[1,1]{1,0:T(1,128)}', space=vmem, size = 0x200, scoped, tag = 'scratch operand']
  #allocation4 [shape = 'f32[1,1]{1,0:T(1,128)}', space=vmem, size = 0x200, scoped, tag = 'scratch operand']
  #allocation5 [shape = 'f32[1,1]{1,0:T(1,128)}', space=vmem, size = 0x200, scoped, tag = 'scratch operand']
  #allocation6 [shape = 'f32[1,1]{1,0:T(1,128)}', space=vmem, size = 0x200, scoped, tag = 'scratch operand']
  #allocation7 [shape = 'f32[1,1]{1,0:T(1,128)}', space=vmem, size = 0x200, scoped, tag = 'scratch operand']
  #allocation8 [shape = 'f32[1,1]{1,0:T(1,128)}', space=vmem, size = 0x200, scoped, tag = 'scratch operand']
  #allocation9 [shape = 'f32[1,1]{1,0:T(1,128)}', space=vmem, size = 0x200, scoped, tag = 'scratch operand']
  %s0 = inlined_call_operand.vmem [shape: f32[2,10,1,128], index: 0, kind: input, shape index: {}]
  %s1 = inlined_call_operand.vmem [shape: f32[2,1,4], index: 1, kind: output, shape index: {}]
  %s2 = sld [smem:[#allocation0]]
  $region45: #{lbp_loss.1} parent=0
    _
  %s4 = ssub.s32 1, %s2
  %s5 = scalar_select 0, %s4, %s2
  loop: start=0, step=1, limit=4
  $region2: #{lbp_loss.1} parent=0 // loop_pre_header
    _
  $region3: #{lbp_loss.1} parent=0 // loop_header
    %s7 = sphi 0, %s11
    %p8 = scmp.ge.s32.totalorder %s7, 4
    %s14 = sphi 0, %s26
    %s15 = sphi 0, %s22
    %s16 = sphi 0, %s14
    %s17 = sphi 0, %s15
    %s18 = sphi 0, %s16
    %s19 = sphi 0, %s17
    %s31 = sphi 0, %s33
    %s34 = sphi 0, %s31
    %s35 = sphi 0, %s34
    %s51 = sphi 0, %s35
    %s57 = sphi 0, %s59
    %s60 = sphi 0, %s57
    %s61 = sphi 0, %s60
    %s77 = sphi 0, %s61
  $region4: #{lbp_loss.1} parent=0 // loop_header_branch
    %10 = sbr.rel (%p8) target = $region8
  $region5: #{lbp_loss.1} parent=0 // loop_body
    %s12 = ssub.s32 %s7, 1
    %s13 = ssub.s32 %s7, 2
    %s20 = sadd.s32 1, %s15
    %p21 = scmp.ge.s32.totalorder %s20, 1
    %s22 = scalar_select %p21, 0, %s20
    %s23 = sadd.s32 1, %s14
    %s24 = scalar_select %p21, %s23, %s14
    %p25 = scmp.ge.s32.totalorder %s24, 2
    %s26 = scalar_select %p25, 0, %s24
    %s27 = ssub.s32 %s14, %s26
    %s28 = ssub.s32 %s15, %s22
    %s29 = sor.u32 %s27, %s28
    %p30 = scmp.eq.s32.totalorder %s29, 0
    %s32 = sadd.s32 %s31, 1
    %s33 = scalar_select %p30, %s31, %s32
    %p36 = pneg %p30
    %p37 = scmp.eq.s32.totalorder %s7, 1
    %p38 = por %p36, %p37
    %p39 = scmp.ne.s32.totalorder %s31, %s34
    %p40 = scmp.eq.s32.totalorder %s7, 0
    %p41 = por %p39, %p40
    %p42 = scmp.ne.s32.totalorder %s31, %s34
    %p43 = scmp.eq.s32.totalorder %s12, 1
    %p44 = por %p42, %p43
    %p45 = scmp.ne.s32.totalorder %s34, %s35
    %p46 = scmp.eq.s32.totalorder %s12, 0
    %p47 = por %p45, %p46
    %p48 = scmp.ne.s32.totalorder %s34, %s35
    %p49 = scmp.eq.s32.totalorder %s13, 1
    %p50 = por %p48, %p49
    %p52 = scmp.ne.s32.totalorder %s35, %s51
    %p53 = scmp.eq.s32.totalorder %s13, 0
    %p54 = por %p52, %p53
    %s55 = ssub.s32 %s14, %s26
    %p56 = scmp.eq.s32.totalorder %s55, 0
    %s58 = sadd.s32 %s57, 1
    %s59 = scalar_select %p56, %s57, %s58
    %p62 = pneg %p56
    %p63 = scmp.eq.s32.totalorder %s7, 1
    %p64 = por %p62, %p63
    %p65 = scmp.ne.s32.totalorder %s57, %s60
    %p66 = scmp.eq.s32.totalorder %s7, 0
    %p67 = por %p65, %p66
    %p68 = scmp.ne.s32.totalorder %s57, %s60
    %p69 = scmp.eq.s32.totalorder %s12, 1
    %p70 = por %p68, %p69
    %p71 = scmp.ne.s32.totalorder %s60, %s61
    %p72 = scmp.eq.s32.totalorder %s12, 0
    %p73 = por %p71, %p72
    %p74 = scmp.ne.s32.totalorder %s60, %s61
    %p75 = scmp.eq.s32.totalorder %s13, 1
    %p76 = por %p74, %p75
    %p78 = scmp.ne.s32.totalorder %s61, %s77
    %p79 = scmp.eq.s32.totalorder %s13, 0
    %p80 = por %p78, %p79
    %p81 = scmp.le.s32.totalorder 1, %s7
    %p82 = scmp.lt.s32.totalorder %s7, 3
    %p83 = pnand %p81, %p82
    %p84 = pneg %p83
    // Predicated region
    $region9: #{lbp_loss.1} parent=5 // pred_check
      _
    $region10: #{lbp_loss.1} parent=5 // pred_check_branch
      %86 = sbr.rel (%p83) target = $region12
    $region11: #{lbp_loss.1} parent=5 // pred_region
      %s87 = ssub.s32 %s7, 1
    $region12: #{lbp_loss.1} parent=5 // pred_fallthru
      _
    %p88 = scmp.lt.s32.totalorder %s7, 2
    // Predicated region
    $region13: #{lbp_loss.1} parent=5 // pred_check
      %p89 = pneg %p88
    $region14: #{lbp_loss.1} parent=5 // pred_check_branch
      %91 = sbr.rel (%p89) target = $region16
    $region15: #{lbp_loss.1} parent=5 // pred_region
      // Predicated region
      $region17: #{lbp_loss.1} parent=15 // pred_check
        %p92 = pneg %p41
      $region18: #{lbp_loss.1} parent=15 // pred_check_branch
        %94 = sbr.rel (%p92) target = $region20
      $region19: #{lbp_loss.1} parent=15 // pred_region
        %p95 = scmp.lt.s32.totalorder %s14, 1
        %s96 = scalar_select %p95, %s14, 1
        %p97 = scmp.lt.s32.totalorder %s15, 0
        %s98 = scalar_select %p97, %s15, 0
        %s99 = smul.addr %s96, 10
        %s100 = sadd.s32 %s98, %s99
        %s101 = scalar_lea.vmem %s0, %s100
      $region20: #{lbp_loss.1} parent=15 // pred_fallthru
        _
    $region16: #{lbp_loss.1} parent=5 // pred_fallthru
      _
    %p102 = scmp.le.s32.totalorder 1, %s7
    %p103 = scmp.lt.s32.totalorder %s7, 3
    %p104 = pnand %p102, %p103
    %p105 = pneg %p104
    // Predicated region
    $region21: #{lbp_loss.1} parent=5 // pred_check
      _
    $region22: #{lbp_loss.1} parent=5 // pred_check_branch
      %107 = sbr.rel (%p104) target = $region24
    $region23: #{lbp_loss.1} parent=5 // pred_region
      %s108 = ssub.s32 %s7, 1
      %p109 = scmp.lt.s32.totalorder %s16, 1
      %s110 = scalar_select %p109, %s16, 1
      %p111 = scmp.lt.s32.totalorder %s17, 0
      %s112 = scalar_select %p111, %s17, 0
      %s113 = smul.addr %s110, 10
      %s114 = sadd.s32 %s112, %s113
      %s115 = scalar_lea.vmem %s0, %s114
      %p116 = pneg %p47
      %p117 = pneg %p44
      %p118 = pneg %p73
      %p119 = pneg %p70
      %p120 = scmp.lt.s32.totalorder %s16, 1
      %s121 = scalar_select %p120, %s16, 1
      %s122 = scalar_lea.vmem %s1, %s121
      %p123 = scmp.lt.s32.totalorder %s16, 1
      %s124 = scalar_select %p123, %s16, 1
      %p125 = scmp.lt.s32.totalorder %s17, 0
      %s126 = scalar_select %p125, %s17, 0
      %s127 = smul.addr %s124, 10
      %s128 = sadd.s32 %s126, %s127
      %s129 = scalar_lea.vmem %s0, %s128
      %p130 = scmp.lt.s32.totalorder %s16, 1
      %s131 = scalar_select %p130, %s16, 1
      %s132 = scalar_lea.vmem %s1, %s131
      %p133 = scmp.eq.s32.totalorder %s17, 0
      // Predicated region
      $region25: #{lbp_loss.1} parent=23 // pred_check
        %p134 = pneg %p133
      $region26: #{lbp_loss.1} parent=23 // pred_check_branch
        %136 = sbr.rel (%p134) target = $region28
      $region27: #{lbp_loss.1} parent=23 // pred_region
        %vm137 = vcmask 0
        %138 = vst.msk [vmem:[#allocation2] sm:$0x1] %vm137, 0.0
        %139 = vst.msk [vmem:[#allocation3] sm:$0x1] %vm137, 0.0
        %140 = vst.msk [vmem:[#allocation4] sm:$0x1] %vm137, 0.0
        %141 = vst.msk [vmem:[#allocation5] sm:$0x1] %vm137, 0.0
        %142 = vst.msk [vmem:[#allocation6] sm:$0x1] %vm137, 0.0
        %143 = vst.msk [vmem:[#allocation7] sm:$0x1] %vm137, 0.0
        %144 = vst.msk [vmem:[#allocation8] sm:$0x1] %vm137, 0.0
        %145 = vst.msk [vmem:[#allocation9] sm:$0x1] %vm137, 0.0
      $region28: #{lbp_loss.1} parent=23 // pred_fallthru
        _
      %v146 = vld [vmem:[%s129] sm:$0x1]
      %s147 = scalar_lea.vmem %s129, 1
      %v148 = vld [vmem:[%s147] sm:$0x1]
      %s149 = scalar_lea.vmem %s129, 2
      %v150 = vld [vmem:[%s149] sm:$0x1]
      %s151 = scalar_lea.vmem %s129, 3
      %v152 = vld [vmem:[%s151] sm:$0x1]
      %s153 = scalar_lea.vmem %s129, 4
      %v154 = vld [vmem:[%s153] sm:$0x1]
      %s155 = scalar_lea.vmem %s129, 5
      %v156 = vld [vmem:[%s155] sm:$0x1]
      %s157 = scalar_lea.vmem %s129, 6
      %v158 = vld [vmem:[%s157] sm:$0x1]
      %s159 = scalar_lea.vmem %s129, 7
      %v160 = vld [vmem:[%s159] sm:$0x1]
      %s161 = scalar_lea.vmem %s129, 8
      %v162 = vld [vmem:[%s161] sm:$0x1]
      %s163 = scalar_lea.vmem %s129, 9
      %v164 = vld [vmem:[%s163] sm:$0x1]
      %v165 = vmax.f32 %v146, 0.0003
      %v166 = vmin.f32 %v165, 0.9997
      %vm167 = vcmp.eq.f32.partialorder %v156, 1.0
      %v168 = vsel %vm167, 0.25, 0.75
      %v169 = vsub.f32 1.0, %v166
      %v170 = vsel %vm167, %v169, %v166
      %v171 = vsel %vm167, %v166, %v169
      %v172 = vlog2.pop %v171
      %v173 = vmul.f32 %v172, 0.6931472
      %v174 = vsub.f32 0.0, %v173
      %vm175 = vcmp.ne.f32.partialorder %v156, -1.0
      %v176 = vmul.f32 %v170, %v170
      %v177 = vmul.f32 %v168, %v176
      %v178 = vmul.f32 %v177, %v174
      %v179 = vsel %vm175, %v178, 0.0
      %vm180 = vcmask 1040384
      %v181 = vsel %vm180, %v179, 0.0
      %182 = vadd.xlane.f32.xlu0 %v181
      %v183 = vpop.xlane.xlu0 %182
      %v184 = vrot.slane %v183, 4
      %v185 = vadd.f32 %v183, %v184
      %v186 = vrot.slane %v185, 2
      %v187 = vadd.f32 %v185, %v186
      %v188 = vrot.slane %v187, 1
      %v189 = vadd.f32 %v187, %v188
      %s190 = vtos %v189
      %v191 = vstv %s190
      %vm192 = vcmp.gt.f32.partialorder %v156, -1.0
      %v193 = vsel %vm192, 1, 0
      %v194 = vcvt.s32.f32 %v193
      %v195 = vsel %vm180, %v194, 0.0
      %196 = vadd.xlane.f32.xlu0 %v195
      %v197 = vpop.xlane.xlu0 %196
      %v198 = vrot.slane %v197, 4
      %v199 = vadd.f32 %v197, %v198
      %v200 = vrot.slane %v199, 2
      %v201 = vadd.f32 %v199, %v200
      %v202 = vrot.slane %v201, 1
      %v203 = vadd.f32 %v201, %v202
      %s204 = vtos %v203
      %v205 = vstv %s204
      %v206 = vld [vmem:[#allocation2] sm:$0x1]
      %v207 = vadd.f32 %v206, %v191
      %vm208 = vcmask 0
      %209 = vst.msk [vmem:[#allocation2] sm:$0x1] %vm208, %v207
      %v210 = vld [vmem:[#allocation3] sm:$0x1]
      %v211 = vadd.f32 %v210, %v205
      %212 = vst.msk [vmem:[#allocation3] sm:$0x1] %vm208, %v211
      %v213 = vmax.f32 %v148, 0.0003
      %v214 = vmin.f32 %v213, 0.9997
      %vm215 = vcmp.eq.f32.partialorder %v158, 1.0
      %v216 = vsel %vm215, 0.25, 0.75
      %v217 = vsub.f32 1.0, %v214
      %v218 = vsel %vm215, %v217, %v214
      %v219 = vsel %vm215, %v214, %v217
      %v220 = vlog2.pop %v219
      %v221 = vmul.f32 %v220, 0.6931472
      %v222 = vsub.f32 0.0, %v221
      %vm223 = vcmp.ne.f32.partialorder %v158, -1.0
      %v224 = vmul.f32 %v218, %v218
      %v225 = vmul.f32 %v216, %v224
      %v226 = vmul.f32 %v225, %v222
      %v227 = vsel %vm223, %v226, 0.0
      %v228 = vsel %vm180, %v227, 0.0
      %229 = vadd.xlane.f32.xlu0 %v228
      %v230 = vpop.xlane.xlu0 %229
      %v231 = vrot.slane %v230, 4
      %v232 = vadd.f32 %v230, %v231
      %v233 = vrot.slane %v232, 2
      %v234 = vadd.f32 %v232, %v233
      %v235 = vrot.slane %v234, 1
      %v236 = vadd.f32 %v234, %v235
      %s237 = vtos %v236
      %v238 = vstv %s237
      %vm239 = vcmp.gt.f32.partialorder %v158, -1.0
      %v240 = vsel %vm239, 1, 0
      %v241 = vcvt.s32.f32 %v240
      %v242 = vsel %vm180, %v241, 0.0
      %243 = vadd.xlane.f32.xlu0 %v242
      %v244 = vpop.xlane.xlu0 %243
      %v245 = vrot.slane %v244, 4
      %v246 = vadd.f32 %v244, %v245
      %v247 = vrot.slane %v246, 2
      %v248 = vadd.f32 %v246, %v247
      %v249 = vrot.slane %v248, 1
      %v250 = vadd.f32 %v248, %v249
      %s251 = vtos %v250
      %v252 = vstv %s251
      %v253 = vld [vmem:[#allocation4] sm:$0x1]
      %v254 = vadd.f32 %v253, %v238
      %255 = vst.msk [vmem:[#allocation4] sm:$0x1] %vm208, %v254
      %v256 = vld [vmem:[#allocation5] sm:$0x1]
      %v257 = vadd.f32 %v256, %v252
      %258 = vst.msk [vmem:[#allocation5] sm:$0x1] %vm208, %v257
      %v259 = vmax.f32 %v150, 0.0003
      %v260 = vmin.f32 %v259, 0.9997
      %vm261 = vcmp.eq.f32.partialorder %v164, 1.0
      %v262 = vsel %vm261, 0.25, 0.75
      %v263 = vsub.f32 1.0, %v260
      %v264 = vsel %vm261, %v263, %v260
      %v265 = vsel %vm261, %v260, %v263
      %v266 = vlog2.pop %v265
      %v267 = vmul.f32 %v266, 0.6931472
      %v268 = vsub.f32 0.0, %v267
      %vm269 = vcmp.ne.f32.partialorder %v164, -1.0
      %v270 = vmul.f32 %v264, %v264
      %v271 = vmul.f32 %v262, %v270
      %v272 = vmul.f32 %v271, %v268
      %v273 = vsel %vm269, %v272, 0.0
      %v274 = vsel %vm180, %v273, 0.0
      %275 = vadd.xlane.f32.xlu0 %v274
      %v276 = vpop.xlane.xlu0 %275
      %v277 = vrot.slane %v276, 4
      %v278 = vadd.f32 %v276, %v277
      %v279 = vrot.slane %v278, 2
      %v280 = vadd.f32 %v278, %v279
      %v281 = vrot.slane %v280, 1
      %v282 = vadd.f32 %v280, %v281
      %s283 = vtos %v282
      %v284 = vstv %s283
      %vm285 = vcmp.gt.f32.partialorder %v164, -1.0
      %v286 = vsel %vm285, 1, 0
      %v287 = vcvt.s32.f32 %v286
      %v288 = vsel %vm180, %v287, 0.0
      %289 = vadd.xlane.f32.xlu0 %v288
      %v290 = vpop.xlane.xlu0 %289
      %v291 = vrot.slane %v290, 4
      %v292 = vadd.f32 %v290, %v291
      %v293 = vrot.slane %v292, 2
      %v294 = vadd.f32 %v292, %v293
      %v295 = vrot.slane %v294, 1
      %v296 = vadd.f32 %v294, %v295
      %s297 = vtos %v296
      %v298 = vstv %s297
      %v299 = vld [vmem:[#allocation6] sm:$0x1]
      %v300 = vadd.f32 %v299, %v284
      %301 = vst.msk [vmem:[#allocation6] sm:$0x1] %vm208, %v300
      %v302 = vld [vmem:[#allocation7] sm:$0x1]
      %v303 = vadd.f32 %v302, %v298
      %304 = vst.msk [vmem:[#allocation7] sm:$0x1] %vm208, %v303
      %v305 = vsub.f32 %v152, %v160
      %v306 = vsub.f32 %v154, %v162
      %v307 = vld [vmem:[#allocation8] sm:$0x1]
      %v308 = vmul.f32 %v305, %v305
      %v309 = vmul.f32 %v306, %v306
      %v310 = vadd.f32 %v308, %v309
      %v311 = vsel %vm215, %v310, 0.0
      %v312 = vsel %vm180, %v311, 0.0
      %313 = vadd.xlane.f32.xlu0 %v312
      %v314 = vpop.xlane.xlu0 %313
      %v315 = vrot.slane %v314, 4
      %v316 = vadd.f32 %v314, %v315
      %v317 = vrot.slane %v316, 2
      %v318 = vadd.f32 %v316, %v317
      %v319 = vrot.slane %v318, 1
      %v320 = vadd.f32 %v318, %v319
      %s321 = vtos %v320
      %v322 = vstv %s321
      %v323 = vadd.f32 %v307, %v322
      %324 = vst.msk [vmem:[#allocation8] sm:$0x1] %vm208, %v323
      %v325 = vld [vmem:[#allocation9] sm:$0x1]
      %v326 = vsel %vm215, 1, 0
      %v327 = vcvt.s32.f32 %v326
      %v328 = vsel %vm180, %v327, 0.0
      %329 = vadd.xlane.f32.xlu0 %v328
      %v330 = vpop.xlane.xlu0 %329
      %v331 = vrot.slane %v330, 4
      %v332 = vadd.f32 %v330, %v331
      %v333 = vrot.slane %v332, 2
      %v334 = vadd.f32 %v332, %v333
      %v335 = vrot.slane %v334, 1
      %v336 = vadd.f32 %v334, %v335
      %s337 = vtos %v336
      %v338 = vstv %s337
      %v339 = vadd.f32 %v325, %v338
      %340 = vst.msk [vmem:[#allocation9] sm:$0x1] %vm208, %v339
      // Predicated region
      $region29: #{lbp_loss.1} parent=23 // pred_check
        %p341 = pneg %p133
      $region30: #{lbp_loss.1} parent=23 // pred_check_branch
        %343 = sbr.rel (%p341) target = $region32
      $region31: #{lbp_loss.1} parent=23 // pred_region
        %v344 = vld [vmem:[#allocation2] sm:$0x1]
        %v345 = vld [vmem:[#allocation3] sm:$0x1]
        %v346 = vmax.f32 %v345, 1.0
        %v347 = vrcp.pop %v346
        %v348 = vmul.f32 %v344, %v347
        %v349 = vld [vmem:[#allocation4] sm:$0x1]
        %v350 = vld [vmem:[#allocation5] sm:$0x1]
        %v351 = vmax.f32 %v350, 1.0
        %v352 = vrcp.pop %v351
        %v353 = vmul.f32 %v349, %v352
        %v354 = vld [vmem:[#allocation6] sm:$0x1]
        %v355 = vld [vmem:[#allocation7] sm:$0x1]
        %v356 = vmax.f32 %v355, 1.0
        %v357 = vrcp.pop %v356
        %v358 = vmul.f32 %v354, %v357
        %v359 = vld [vmem:[#allocation8] sm:$0x1]
        %v360 = vld [vmem:[#allocation9] sm:$0x1]
        %v361 = vmul.f32 %v360, 2.0
        %v362 = vmax.f32 %v361, 1.0
        %v363 = vrcp.pop %v362
        %v364 = vmul.f32 %v359, %v363
        %v365 = vlaneseq
        %v366 = vand.u32 %v365, 127
        %vm367 = vcmp.eq.s32.totalorder %v366, 0
        %369 = vset.pattern.permute.xlu0 0
        %370 = vperm.xlu0 %369, %v348
        %v371 = vpop.permute.xlu0 %370
        %v373 = vlaneseq
        %v374 = vshrl.u32 %v373, 7
        %v375 = vsub.s32 0, %v374
        %v376 = vrot.slane %v371, %v375
        %v377 = vsel %vm367, %v376, 0.0
        %vm378 = vcmp.eq.s32.totalorder %v366, 1
        %380 = vset.pattern.permute.xlu0 0
        %381 = vperm.xlu0 %380, %v353
        %v382 = vpop.permute.xlu0 %381
        %v384 = vlaneseq
        %v385 = vshrl.u32 %v384, 7
        %v386 = vsub.s32 0, %v385
        %v387 = vrot.slane %v382, %v386
        %v388 = vsel %vm378, %v387, 0.0
        %v389 = vadd.f32 %v377, %v388
        %vm390 = vcmp.eq.s32.totalorder %v366, 2
        %392 = vset.pattern.permute.xlu0 0
        %393 = vperm.xlu0 %392, %v358
        %v394 = vpop.permute.xlu0 %393
        %v396 = vlaneseq
        %v397 = vshrl.u32 %v396, 7
        %v398 = vsub.s32 0, %v397
        %v399 = vrot.slane %v394, %v398
        %v400 = vsel %vm390, %v399, 0.0
        %v401 = vadd.f32 %v389, %v400
        %vm402 = vcmp.eq.s32.totalorder %v366, 3
        %404 = vset.pattern.permute.xlu0 0
        %405 = vperm.xlu0 %404, %v364
        %v406 = vpop.permute.xlu0 %405
        %v408 = vlaneseq
        %v409 = vshrl.u32 %v408, 7
        %v410 = vsub.s32 0, %v409
        %v411 = vrot.slane %v406, %v410
        %v412 = vsel %vm402, %v411, 0.0
        %v413 = vadd.f32 %v401, %v412
        %vm414 = vcmask 24576
        %415 = vst.msk [vmem:[%s132] sm:$0x1] %vm414, %v413
      $region32: #{lbp_loss.1} parent=23 // pred_fallthru
        _
      %p416 = scmp.lt.s32.totalorder %s16, 1
      %s417 = scalar_select %p416, %s16, 1
      %s418 = scalar_lea.vmem %s1, %s417
      // Predicated region
      $region33: #{lbp_loss.1} parent=23 // pred_check
        %p419 = pneg %p70
      $region34: #{lbp_loss.1} parent=23 // pred_check_branch
        %421 = sbr.rel (%p419) target = $region36
      $region35: #{lbp_loss.1} parent=23 // pred_region
        _
      $region36: #{lbp_loss.1} parent=23 // pred_fallthru
        _
    $region24: #{lbp_loss.1} parent=5 // pred_fallthru
      _
    %p422 = scmp.le.s32.totalorder 2, %s7
    // Predicated region
    $region37: #{lbp_loss.1} parent=5 // pred_check
      %p423 = pneg %p422
    $region38: #{lbp_loss.1} parent=5 // pred_check_branch
      %425 = sbr.rel (%p423) target = $region40
    $region39: #{lbp_loss.1} parent=5 // pred_region
      %s426 = ssub.s32 %s7, 2
      // Predicated region
      $region41: #{lbp_loss.1} parent=39 // pred_check
        %p427 = pneg %p76
      $region42: #{lbp_loss.1} parent=39 // pred_check_branch
        %429 = sbr.rel (%p427) target = $region44
      $region43: #{lbp_loss.1} parent=39 // pred_region
        %p430 = scmp.lt.s32.totalorder %s18, 1
        %s431 = scalar_select %p430, %s18, 1
        %s432 = scalar_lea.vmem %s1, %s431
      $region44: #{lbp_loss.1} parent=39 // pred_fallthru
        _
    $region40: #{lbp_loss.1} parent=5 // pred_fallthru
      _
  $region6: #{lbp_loss.1} parent=0 // loop_footer
    %s11 = sadd.s32 1, %s7
  $region7: #{lbp_loss.1} parent=0 // loop_footer_branch
    %6 = sbr.rel target = $region3
  $region8: #{lbp_loss.1} parent=0 // loop_exit
    _

</llo_original>
